<compile_context>
chip_gen: v7x
topology: tpu7x:2x2x1
jax: 0.10.0
libtpu: 0.0.40
codegen_flags: <defaults>
</compile_context>

<pallas_src>
import functools
import math

import numpy as np
import jax
import jax.numpy as jnp
from jax.experimental import pallas as pl
from jax.experimental.pallas import tpu as pltpu


def _gelu_exact(x):
    # PyTorch nn.GELU() default: exact erf-based GELU.
    return 0.5 * x * (1.0 + jax.lax.erf(x * (1.0 / math.sqrt(2.0))))


def _predictor_kernel(x_ref, w1_ref, p_ref, o_ref, *, eps, inv_n, bb):
    """One grid step: `bb` batch elements, channels-on-sublane layout.

    x_ref : (bb, C, N)  tokens with N on the lane axis, C on sublanes.
    w1_ref: (C, C)      in_conv Linear weight (out, in); LN gamma pre-folded in.
    p_ref : (C, 4)      packed columns: [b1', w2_local, w2_global, b2] (one DMA).
    o_ref : (bb, 1, N)  lane-dense output (wrapper reshapes to (B, N, 1)).
    """
    b1_col = p_ref[:, 0:1]      # (C, 1)  Linear bias (+ folded LN beta term)
    w2_lo  = p_ref[:, 1:2]      # (C, 1)  out_conv weight, upper half zeroed (local)
    w2_hi  = p_ref[:, 2:3]      # (C, 1)  out_conv weight, lower half zeroed (global)
    b2     = p_ref[0:1, 3:4]    # (1, 1)  out_conv bias
    w1p    = w1_ref[...]        # (C, C)

    for b in range(bb):         # static unroll (bb in {1, 2})
        xt = x_ref[b]                                           # (C, N)

        # LayerNorm over channels (sublane axis); affine folded into w1p / b1'.
        mu = jnp.mean(xt, axis=0, keepdims=True)                # (1, N)
        xc = xt - mu
        var = jnp.mean(xc * xc, axis=0, keepdims=True)          # (1, N)
        xn = xc * jax.lax.rsqrt(var + eps)                      # (C, N)

        # Linear(C -> C) + GELU: one MXU matmul per batch element.
        y = jnp.dot(w1p, xn, preferred_element_type=jnp.float32) + b1_col
        y = _gelu_exact(y)                                      # (C, N), lane-dense

        # local/global mix fused with Linear(C -> 1):
        #   z[n] = sum_{c<C/2} y[c,n] w2[c]
        #        + mean_n' sum_{c>=C/2} y[c,n'] w2[c]  + b2
        # (mean over tokens and the dot commute -> no concat / no broadcast needed)
        z_local = jnp.sum(y * w2_lo, axis=0, keepdims=True)     # (1, N)
        s_hi    = jnp.sum(y * w2_hi, axis=0, keepdims=True)     # (1, N)
        # NOTE: this block holds all N real tokens (block = full token axis), so the
        # token mean divides by the true count; re-derive if N is ever tiled/padded.
        z_glob  = jnp.sum(s_hi, axis=1, keepdims=True) * inv_n  # (1, 1)
        z = z_local + (z_glob + b2)                             # (1, N)

        o_ref[b] = _gelu_exact(z)                               # full-lane store


def _tensorcores_per_chip():
    try:
        kind = jax.devices()[0].device_kind.lower()
    except Exception:
        return 1
    return 2 if ("v7" in kind or "tpu7" in kind) else 1


def predictor_lg(x, ln_gamma, ln_beta, w1, b1, w2, b2, *, eps=1e-5):
    """PredictorLG forward.

    x:  (B, N, C) float32 tokens.
    ln_gamma, ln_beta: (C,) LayerNorm affine params.
    w1: (C, C)  in_conv Linear weight in PyTorch (out, in) layout;  b1: (C,).
    w2: (1, C)  out_conv Linear weight;                             b2: (1,).
    Returns (B, N, 1) float32, matching the PyTorch module.
    """
    B, N, C = x.shape
    Ch = C // 2
    f32 = jnp.float32

    # Channels-on-sublane layout: tokens on the 128-lane axis (tiny wrapper transpose).
    x_t = jnp.transpose(x.astype(f32), (0, 2, 1))               # (B, C, N)

    # Fold the LayerNorm affine into the Linear (exact algebra):
    #   (xn*g + b) @ W1^T + b1  ==  xn @ (W1*g)^T + (W1 @ b + b1)
    w1 = jnp.asarray(w1, f32)
    gamma = jnp.asarray(ln_gamma, f32)
    beta = jnp.asarray(ln_beta, f32)
    w1p = w1 * gamma[None, :]                                    # (C, C), (out, in)
    b1p = jnp.asarray(b1, f32) + w1 @ beta                       # (C,)

    # Pre-mask the out_conv weight halves (local / global branches).
    w2_row = jnp.asarray(w2, f32).reshape(C)
    lo = (jnp.arange(C) < Ch).astype(f32)
    w2_lo = w2_row * lo
    w2_hi = w2_row * (1.0 - lo)
    b2_col = jnp.full((C,), jnp.asarray(b2, f32).reshape(()), f32)

    # Single packed param block -> one prologue DMA instead of six.
    params = jnp.stack([b1p, w2_lo, w2_hi, b2_col], axis=1)      # (C, 4)

    # Grid choice: one batch element per TensorCore on 2-TC chips (v7x);
    # collapse to a single grid step on single-TC chips (v5e/v6e).
    bb = 1 if (_tensorcores_per_chip() >= 2 and B > 1) else B
    grid_b = B // bb

    out = pl.pallas_call(
        functools.partial(_predictor_kernel, eps=eps, inv_n=1.0 / N, bb=bb),
        out_shape=jax.ShapeDtypeStruct((B, 1, N), f32),
        grid=(grid_b,),
        in_specs=[
            pl.BlockSpec((bb, C, N), lambda g: (g, 0, 0)),       # x, channels-on-sublane
            pl.BlockSpec((C, C), lambda g: (0, 0)),              # w1 (gamma folded)
            pl.BlockSpec((C, 4), lambda g: (0, 0)),              # packed params
        ],
        out_specs=pl.BlockSpec((bb, 1, N), lambda g: (g, 0, 0)),
        compiler_params=pltpu.CompilerParams(dimension_semantics=("parallel",)),
    )(x_t, w1p, params)

    # Free reshape (middle dim is 1) back to the module's (B, N, 1) output.
    return out.reshape(B, N, 1)


def _reference(x, ln_gamma, ln_beta, w1, b1, w2, b2, eps=1e-5):
    """Pure-JAX reference matching the PyTorch forward."""
    mu = jnp.mean(x, axis=-1, keepdims=True)
    var = jnp.mean((x - mu) ** 2, axis=-1, keepdims=True)
    xn = (x - mu) / jnp.sqrt(var + eps) * ln_gamma + ln_beta
    y = _gelu_exact(xn @ w1.T + b1)
    B, N, C = y.shape
    Ch = C // 2
    local_x = y[:, :, :Ch]
    global_x = jnp.mean(y[:, :, Ch:], axis=1, keepdims=True)
    cat = jnp.concatenate([local_x, jnp.broadcast_to(global_x, (B, N, Ch))], axis=-1)
    z = cat @ w2.T + b2
    return _gelu_exact(z)


if __name__ == "__main__":
    key = jax.random.PRNGKey(0)
    ks = jax.random.split(key, 7)

    # Small shapes consistent with the module: embed_dim=32, 128 tokens, batch 2.
    B, N, C = 2, 128, 32
    x = jax.random.normal(ks[0], (B, N, C), jnp.float32)
    ln_gamma = 1.0 + 0.1 * jax.random.normal(ks[1], (C,), jnp.float32)
    ln_beta = 0.1 * jax.random.normal(ks[2], (C,), jnp.float32)
    w1 = jax.random.normal(ks[3], (C, C), jnp.float32) / math.sqrt(C)
    b1 = 0.1 * jax.random.normal(ks[4], (C,), jnp.float32)
    w2 = jax.random.normal(ks[5], (1, C), jnp.float32) / math.sqrt(C)
    b2 = 0.1 * jax.random.normal(ks[6], (1,), jnp.float32)

    out = predictor_lg(x, ln_gamma, ln_beta, w1, b1, w2, b2)
    jax.block_until_ready(out)
    assert out.shape == (B, N, 1)

    ref = _reference(x, ln_gamma, ln_beta, w1, b1, w2, b2)
    np.testing.assert_allclose(np.asarray(out), np.asarray(ref),
                               rtol=1e-3, atol=1e-4)
    print("KERNEL_OK")
</pallas_src>

<mosaic_0001>
module attributes {stable_mosaic.version = 11 : i64} {
  func.func @_predictor_kernel(%arg0: i32, %arg1: memref<2x32x128xf32, #tpu.memory_space<vmem>>, %arg2: memref<32x32xf32, #tpu.memory_space<vmem>>, %arg3: memref<32x4xf32, #tpu.memory_space<vmem>>, %arg4: memref<2x1x128xf32, #tpu.memory_space<vmem>>) attributes {dimension_semantics = [#tpu.dimension_semantics<parallel>], iteration_bounds = array<i64: 1>, scalar_prefetch = 0 : i64, scratch_operands = 0 : i64, tpu.core_type = #tpu.core_type<tc>, window_params = [{transform_indices = @transform_0, window_bounds = array<i64: 2, 32, 128>}, {pipeline_mode = #tpu.pipeline_mode<synchronous>, transform_indices = @transform_1, window_bounds = array<i64: 32, 32>}, {pipeline_mode = #tpu.pipeline_mode<synchronous>, transform_indices = @transform_2, window_bounds = array<i64: 32, 4>}, {transform_indices = @transform_3, window_bounds = array<i64: 2, 1, 128>}]} {
    %c0 = arith.constant 0 : index
    %c0_0 = arith.constant 0 : index
    %0 = vector.load %arg3[%c0, %c0_0] : memref<32x4xf32, #tpu.memory_space<vmem>>, vector<32x1xf32>
    %c0_1 = arith.constant 0 : index
    %c1 = arith.constant 1 : index
    %1 = vector.load %arg3[%c0_1, %c1] : memref<32x4xf32, #tpu.memory_space<vmem>>, vector<32x1xf32>
    %c0_2 = arith.constant 0 : index
    %c2 = arith.constant 2 : index
    %2 = vector.load %arg3[%c0_2, %c2] : memref<32x4xf32, #tpu.memory_space<vmem>>, vector<32x1xf32>
    %c0_3 = arith.constant 0 : index
    %c3 = arith.constant 3 : index
    %3 = vector.load %arg3[%c0_3, %c3] : memref<32x4xf32, #tpu.memory_space<vmem>>, vector<1x1xf32>
    %c0_4 = arith.constant 0 : index
    %c0_5 = arith.constant 0 : index
    %4 = vector.load %arg2[%c0_4, %c0_5] : memref<32x32xf32, #tpu.memory_space<vmem>>, vector<32x32xf32>
    %c0_6 = arith.constant 0 : index
    %c0_7 = arith.constant 0 : index
    %c0_8 = arith.constant 0 : index
    %5 = vector.load %arg1[%c0_6, %c0_7, %c0_8] : memref<2x32x128xf32, #tpu.memory_space<vmem>>, vector<1x32x128xf32>
    %6 = vector.shape_cast %5 : vector<1x32x128xf32> to vector<32x128xf32>
    %cst = arith.constant dense<0.000000e+00> : vector<128xf32>
    %7 = vector.multi_reduction <add>, %6, %cst [0] : vector<32x128xf32> to vector<128xf32>
    %8 = vector.shape_cast %7 : vector<128xf32> to vector<1x128xf32>
    %cst_9 = arith.constant 3.200000e+01 : f32
    %9 = vector.broadcast %cst_9 : f32 to vector<1x128xf32>
    %10 = arith.divf %8, %9 : vector<1x128xf32>
    %11 = vector.broadcast %10 : vector<1x128xf32> to vector<32x128xf32>
    %12 = arith.subf %6, %11 : vector<32x128xf32>
    %13 = arith.mulf %12, %12 : vector<32x128xf32>
    %cst_10 = arith.constant dense<0.000000e+00> : vector<128xf32>
    %14 = vector.multi_reduction <add>, %13, %cst_10 [0] : vector<32x128xf32> to vector<128xf32>
    %15 = vector.shape_cast %14 : vector<128xf32> to vector<1x128xf32>
    %cst_11 = arith.constant 3.200000e+01 : f32
    %16 = vector.broadcast %cst_11 : f32 to vector<1x128xf32>
    %17 = arith.divf %15, %16 : vector<1x128xf32>
    %cst_12 = arith.constant 9.99999974E-6 : f32
    %18 = vector.broadcast %cst_12 : f32 to vector<1x128xf32>
    %19 = arith.addf %17, %18 : vector<1x128xf32>
    %20 = math.rsqrt %19 : vector<1x128xf32>
    %21 = vector.broadcast %20 : vector<1x128xf32> to vector<32x128xf32>
    %22 = arith.mulf %12, %21 : vector<32x128xf32>
    %cst_13 = arith.constant dense<0.000000e+00> : vector<32x128xf32>
    %23 = tpu.matmul %4, %22, %cst_13 {dimension_numbers = #tpu.dot_dimension_numbers<[1], [0], [0], [1], [0, 0, 1, 1], [], []>} : vector<32x32xf32>, vector<32x128xf32>, vector<32x128xf32> -> vector<32x128xf32>
    %24 = vector.broadcast %0 : vector<32x1xf32> to vector<32x128xf32>
    %25 = arith.addf %23, %24 : vector<32x128xf32>
    %cst_14 = arith.constant 5.000000e-01 : f32
    %26 = vector.broadcast %cst_14 : f32 to vector<32x128xf32>
    %27 = arith.mulf %26, %25 : vector<32x128xf32>
    %cst_15 = arith.constant 0.707106769 : f32
    %28 = vector.broadcast %cst_15 : f32 to vector<32x128xf32>
    %29 = arith.mulf %25, %28 : vector<32x128xf32>
    %30 = math.erf %29 : vector<32x128xf32>
    %cst_16 = arith.constant 1.000000e+00 : f32
    %31 = vector.broadcast %cst_16 : f32 to vector<32x128xf32>
    %32 = arith.addf %31, %30 : vector<32x128xf32>
    %33 = arith.mulf %27, %32 : vector<32x128xf32>
    %34 = vector.broadcast %1 : vector<32x1xf32> to vector<32x128xf32>
    %35 = arith.mulf %33, %34 : vector<32x128xf32>
    %cst_17 = arith.constant dense<0.000000e+00> : vector<128xf32>
    %36 = vector.multi_reduction <add>, %35, %cst_17 [0] : vector<32x128xf32> to vector<128xf32>
    %37 = vector.shape_cast %36 : vector<128xf32> to vector<1x128xf32>
    %38 = vector.broadcast %2 : vector<32x1xf32> to vector<32x128xf32>
    %39 = arith.mulf %33, %38 : vector<32x128xf32>
    %cst_18 = arith.constant dense<0.000000e+00> : vector<128xf32>
    %40 = vector.multi_reduction <add>, %39, %cst_18 [0] : vector<32x128xf32> to vector<128xf32>
    %41 = vector.shape_cast %40 : vector<128xf32> to vector<1x128xf32>
    %cst_19 = arith.constant dense<0.000000e+00> : vector<1xf32>
    %42 = vector.multi_reduction <add>, %41, %cst_19 [1] : vector<1x128xf32> to vector<1xf32>
    %43 = vector.shape_cast %42 : vector<1xf32> to vector<1x1xf32>
    %cst_20 = arith.constant 7.812500e-03 : f32
    %44 = vector.broadcast %cst_20 : f32 to vector<1x1xf32>
    %45 = arith.mulf %43, %44 : vector<1x1xf32>
    %46 = arith.addf %45, %3 : vector<1x1xf32>
    %47 = vector.broadcast %46 : vector<1x1xf32> to vector<1x128xf32>
    %48 = arith.addf %37, %47 : vector<1x128xf32>
    %cst_21 = arith.constant 5.000000e-01 : f32
    %49 = vector.broadcast %cst_21 : f32 to vector<1x128xf32>
    %50 = arith.mulf %49, %48 : vector<1x128xf32>
    %cst_22 = arith.constant 0.707106769 : f32
    %51 = vector.broadcast %cst_22 : f32 to vector<1x128xf32>
    %52 = arith.mulf %48, %51 : vector<1x128xf32>
    %53 = math.erf %52 : vector<1x128xf32>
    %cst_23 = arith.constant 1.000000e+00 : f32
    %54 = vector.broadcast %cst_23 : f32 to vector<1x128xf32>
    %55 = arith.addf %54, %53 : vector<1x128xf32>
    %56 = arith.mulf %50, %55 : vector<1x128xf32>
    %c0_24 = arith.constant 0 : index
    %c0_25 = arith.constant 0 : index
    %c0_26 = arith.constant 0 : index
    %57 = vector.load %arg4[%c0_24, %c0_25, %c0_26] : memref<2x1x128xf32, #tpu.memory_space<vmem>>, vector<1x1x128xf32>
    %58 = vector.shape_cast %57 : vector<1x1x128xf32> to vector<1x128xf32>
    %59 = vector.shape_cast %56 : vector<1x128xf32> to vector<1x1x128xf32>
    tpu.vector_store %arg4[%c0_24, %c0_25, %c0_26], %59 {strides = array<i32>} : memref<2x1x128xf32, #tpu.memory_space<vmem>>, vector<1x1x128xf32>,
    %c1_27 = arith.constant 1 : index
    %c0_28 = arith.constant 0 : index
    %c0_29 = arith.constant 0 : index
    %60 = vector.load %arg1[%c1_27, %c0_28, %c0_29] : memref<2x32x128xf32, #tpu.memory_space<vmem>>, vector<1x32x128xf32>
    %61 = vector.shape_cast %60 : vector<1x32x128xf32> to vector<32x128xf32>
    %cst_30 = arith.constant dense<0.000000e+00> : vector<128xf32>
    %62 = vector.multi_reduction <add>, %61, %cst_30 [0] : vector<32x128xf32> to vector<128xf32>
    %63 = vector.shape_cast %62 : vector<128xf32> to vector<1x128xf32>
    %cst_31 = arith.constant 3.200000e+01 : f32
    %64 = vector.broadcast %cst_31 : f32 to vector<1x128xf32>
    %65 = arith.divf %63, %64 : vector<1x128xf32>
    %66 = vector.broadcast %65 : vector<1x128xf32> to vector<32x128xf32>
    %67 = arith.subf %61, %66 : vector<32x128xf32>
    %68 = arith.mulf %67, %67 : vector<32x128xf32>
    %cst_32 = arith.constant dense<0.000000e+00> : vector<128xf32>
    %69 = vector.multi_reduction <add>, %68, %cst_32 [0] : vector<32x128xf32> to vector<128xf32>
    %70 = vector.shape_cast %69 : vector<128xf32> to vector<1x128xf32>
    %cst_33 = arith.constant 3.200000e+01 : f32
    %71 = vector.broadcast %cst_33 : f32 to vector<1x128xf32>
    %72 = arith.divf %70, %71 : vector<1x128xf32>
    %cst_34 = arith.constant 9.99999974E-6 : f32
    %73 = vector.broadcast %cst_34 : f32 to vector<1x128xf32>
    %74 = arith.addf %72, %73 : vector<1x128xf32>
    %75 = math.rsqrt %74 : vector<1x128xf32>
    %76 = vector.broadcast %75 : vector<1x128xf32> to vector<32x128xf32>
    %77 = arith.mulf %67, %76 : vector<32x128xf32>
    %cst_35 = arith.constant dense<0.000000e+00> : vector<32x128xf32>
    %78 = tpu.matmul %4, %77, %cst_35 {dimension_numbers = #tpu.dot_dimension_numbers<[1], [0], [0], [1], [0, 0, 1, 1], [], []>} : vector<32x32xf32>, vector<32x128xf32>, vector<32x128xf32> -> vector<32x128xf32>
    %79 = vector.broadcast %0 : vector<32x1xf32> to vector<32x128xf32>
    %80 = arith.addf %78, %79 : vector<32x128xf32>
    %cst_36 = arith.constant 5.000000e-01 : f32
    %81 = vector.broadcast %cst_36 : f32 to vector<32x128xf32>
    %82 = arith.mulf %81, %80 : vector<32x128xf32>
    %cst_37 = arith.constant 0.707106769 : f32
    %83 = vector.broadcast %cst_37 : f32 to vector<32x128xf32>
    %84 = arith.mulf %80, %83 : vector<32x128xf32>
    %85 = math.erf %84 : vector<32x128xf32>
    %cst_38 = arith.constant 1.000000e+00 : f32
    %86 = vector.broadcast %cst_38 : f32 to vector<32x128xf32>
    %87 = arith.addf %86, %85 : vector<32x128xf32>
    %88 = arith.mulf %82, %87 : vector<32x128xf32>
    %89 = vector.broadcast %1 : vector<32x1xf32> to vector<32x128xf32>
    %90 = arith.mulf %88, %89 : vector<32x128xf32>
    %cst_39 = arith.constant dense<0.000000e+00> : vector<128xf32>
    %91 = vector.multi_reduction <add>, %90, %cst_39 [0] : vector<32x128xf32> to vector<128xf32>
    %92 = vector.shape_cast %91 : vector<128xf32> to vector<1x128xf32>
    %93 = vector.broadcast %2 : vector<32x1xf32> to vector<32x128xf32>
    %94 = arith.mulf %88, %93 : vector<32x128xf32>
    %cst_40 = arith.constant dense<0.000000e+00> : vector<128xf32>
    %95 = vector.multi_reduction <add>, %94, %cst_40 [0] : vector<32x128xf32> to vector<128xf32>
    %96 = vector.shape_cast %95 : vector<128xf32> to vector<1x128xf32>
    %cst_41 = arith.constant dense<0.000000e+00> : vector<1xf32>
    %97 = vector.multi_reduction <add>, %96, %cst_41 [1] : vector<1x128xf32> to vector<1xf32>
    %98 = vector.shape_cast %97 : vector<1xf32> to vector<1x1xf32>
    %cst_42 = arith.constant 7.812500e-03 : f32
    %99 = vector.broadcast %cst_42 : f32 to vector<1x1xf32>
    %100 = arith.mulf %98, %99 : vector<1x1xf32>
    %101 = arith.addf %100, %3 : vector<1x1xf32>
    %102 = vector.broadcast %101 : vector<1x1xf32> to vector<1x128xf32>
    %103 = arith.addf %92, %102 : vector<1x128xf32>
    %cst_43 = arith.constant 5.000000e-01 : f32
    %104 = vector.broadcast %cst_43 : f32 to vector<1x128xf32>
    %105 = arith.mulf %104, %103 : vector<1x128xf32>
    %cst_44 = arith.constant 0.707106769 : f32
    %106 = vector.broadcast %cst_44 : f32 to vector<1x128xf32>
    %107 = arith.mulf %103, %106 : vector<1x128xf32>
    %108 = math.erf %107 : vector<1x128xf32>
    %cst_45 = arith.constant 1.000000e+00 : f32
    %109 = vector.broadcast %cst_45 : f32 to vector<1x128xf32>
    %110 = arith.addf %109, %108 : vector<1x128xf32>
    %111 = arith.mulf %105, %110 : vector<1x128xf32>
    %c1_46 = arith.constant 1 : index
    %c0_47 = arith.constant 0 : index
    %c0_48 = arith.constant 0 : index
    %112 = vector.load %arg4[%c1_46, %c0_47, %c0_48] : memref<2x1x128xf32, #tpu.memory_space<vmem>>, vector<1x1x128xf32>
    %113 = vector.shape_cast %112 : vector<1x1x128xf32> to vector<1x128xf32>
    %114 = vector.shape_cast %111 : vector<1x128xf32> to vector<1x1x128xf32>
    tpu.vector_store %arg4[%c1_46, %c0_47, %c0_48], %114 {strides = array<i32>} : memref<2x1x128xf32, #tpu.memory_space<vmem>>, vector<1x1x128xf32>,
    return
  }
  func.func @transform_0(%arg0: i32) -> (i32, i32, i32) {
    %c0_i32 = arith.constant 0 : i32
    %c0_i32_0 = arith.constant 0 : i32
    %c0_i32_1 = arith.constant 0 : i32
    return %arg0, %c0_i32, %c0_i32_0 : i32, i32, i32
  }
  func.func @transform_1(%arg0: i32) -> (i32, i32) {
    %c0_i32 = arith.constant 0 : i32
    %c0_i32_0 = arith.constant 0 : i32
    %c0_i32_1 = arith.constant 0 : i32
    return %c0_i32, %c0_i32_0 : i32, i32
  }
  func.func @transform_2(%arg0: i32) -> (i32, i32) {
    %c0_i32 = arith.constant 0 : i32
    %c0_i32_0 = arith.constant 0 : i32
    %c0_i32_1 = arith.constant 0 : i32
    return %c0_i32, %c0_i32_0 : i32, i32
  }
  func.func @transform_3(%arg0: i32) -> (i32, i32, i32) {
    %c0_i32 = arith.constant 0 : i32
    %c0_i32_0 = arith.constant 0 : i32
    %c0_i32_1 = arith.constant 0 : i32
    return %arg0, %c0_i32, %c0_i32_0 : i32, i32, i32
  }
}

</mosaic_0001>

<llo_original>
// kernel: tpu_custom_call.1
$region0: #{tpu_custom_call.1}
  #allocation0 [shape = 'u32[]', space=smem, size = 0x4, offset = 0x4, fixed_abs, tag = 'smem constant byte address 0x4 - core index']
  #allocation1 [shape = 'u32[144,128]{1,0:T(1,128)}', space=vmem, size = 0x12000, scoped, tag = 'internal scratch']
  %s0 = inlined_call_operand.hbm [shape: f32[2,32,128], index: 0, kind: input, shape index: {}]
  %s1 = inlined_call_operand.vmem [shape: f32[32,32], index: 1, kind: input, shape index: {}]
  %s2 = inlined_call_operand.vmem [shape: f32[32,4], index: 2, kind: input, shape index: {}]
  %s3 = inlined_call_operand.hbm [shape: f32[2,1,128], index: 3, kind: output, shape index: {}]
  %s4 = sld [smem:[#allocation0]]
  $region26: #{tpu_custom_call.1} parent=0
    _
  %s6 = ssub.s32 1, %s4
  %s7 = scalar_select 0, %s6, %s4
  $region1: #{tpu_custom_call.1} parent=0
    #allocation2 [shape = 'u8[32768]{0}', space=vmem, size = 0x8000, scoped, tag = 'input window, operand 0, single buffered']
    #allocation3 [shape = 's32[1]{0}', space=sflag, size = 0x4, scoped, tag = 'scoped memory for tpu_custom_call.1']
    #allocation4 [shape = 's32[1]{0}', space=sflag, size = 0x4, scoped, tag = 'scoped memory for tpu_custom_call.1']
    #allocation5 [shape = 'u8[1024]{0}', space=vmem, size = 0x400, scoped, tag = 'output window, operand 0, single buffered']
    %8 = vsyncpa [#allocation3], 0
    %9 = vsyncpa [#allocation4], 0
    // Predicated region
    $region2: #{tpu_custom_call.1} parent=1 // pred_check
      _
    $region3: #{tpu_custom_call.1} parent=1 // pred_check_branch
      %11 = sbr.rel (0) target = $region5
    $region4: #{tpu_custom_call.1} parent=1 // pred_region
      %s13 = ssub.s32 1024, 1024
      %14 = vsyncadd [#allocation3], %s13
      %s15 = sshll.u32 [#allocation2], 4
      %s16 = int_to_ptr.vmem [resolvable:$true] %s15
      %21 = dma.hbm_to_vmem [thread:$0]  %s0, 1024, %s16, [#allocation3], 128, 128, 8
    $region5: #{tpu_custom_call.1} parent=1 // pred_fallthru
      _
    // Predicated region
    $region6: #{tpu_custom_call.1} parent=1 // pred_check
      _
    $region7: #{tpu_custom_call.1} parent=1 // pred_check_branch
      %23 = sbr.rel (0) target = $region9
    $region8: #{tpu_custom_call.1} parent=1 // pred_region
      _
    $region9: #{tpu_custom_call.1} parent=1 // pred_fallthru
      _
    // Predicated region
    $region10: #{tpu_custom_call.1} parent=1 // pred_check
      _
    $region11: #{tpu_custom_call.1} parent=1 // pred_check_branch
      %25 = sbr.rel (0) target = $region13
    $region12: #{tpu_custom_call.1} parent=1 // pred_region
      _
    $region13: #{tpu_custom_call.1} parent=1 // pred_fallthru
      _
    // Predicated region
    $region14: #{tpu_custom_call.1} parent=1 // pred_check
      _
    $region15: #{tpu_custom_call.1} parent=1 // pred_check_branch
      %27 = sbr.rel (0) target = $region17
    $region16: #{tpu_custom_call.1} parent=1 // pred_region
      %28 = dma.done [#allocation3], 1024
    $region17: #{tpu_custom_call.1} parent=1 // pred_fallthru
      _
    %v29 = vld [vmem:[%s2] sm:$0xff]
    %v30 = vld [vmem:[%s2 + $0x8] sm:$0xff]
    %v31 = vld [vmem:[%s2 + $0x10] sm:$0xff]
    %v32 = vld [vmem:[%s2 + $0x18] sm:$0xff]
    %v33 = vld [vmem:[%s2] sm:$0x1]
    %v34 = vld [vmem:[%s1] sm:$0xff]
    %v35 = vld [vmem:[%s1 + $0x8] sm:$0xff]
    %v36 = vld [vmem:[%s1 + $0x10] sm:$0xff]
    %v37 = vld [vmem:[%s1 + $0x18] sm:$0xff]
    %v38 = vld [vmem:[#allocation2] sm:$0xff]
    %v39 = vld [vmem:[#allocation2 + $0x8] sm:$0xff]
    %v40 = vld [vmem:[#allocation2 + $0x10] sm:$0xff]
    %v41 = vld [vmem:[#allocation2 + $0x18] sm:$0xff]
    %v42 = vadd.f32 %v38, %v39
    %v43 = vadd.f32 %v42, %v40
    %v44 = vadd.f32 %v43, %v41
    %v45 = vrot.slane %v44, 4
    %v46 = vadd.f32 %v44, %v45
    %v47 = vrot.slane %v46, 2
    %v48 = vadd.f32 %v46, %v47
    %v49 = vrot.slane %v48, 1
    %v50 = vadd.f32 %v48, %v49
    %v51 = vrcp.pop 32.0
    %v52 = vmul.f32 %v50, %v51
    %v53 = vsub.f32 %v38, %v52
    %v54 = vsub.f32 %v39, %v52
    %v55 = vsub.f32 %v40, %v52
    %v56 = vsub.f32 %v41, %v52
    %v57 = vmul.f32 %v53, %v53
    %v58 = vmul.f32 %v54, %v54
    %v59 = vmul.f32 %v55, %v55
    %v60 = vmul.f32 %v56, %v56
    %v61 = vadd.f32 %v57, %v58
    %v62 = vadd.f32 %v61, %v59
    %v63 = vadd.f32 %v62, %v60
    %v64 = vrot.slane %v63, 4
    %v65 = vadd.f32 %v63, %v64
    %v66 = vrot.slane %v65, 2
    %v67 = vadd.f32 %v65, %v66
    %v68 = vrot.slane %v67, 1
    %v69 = vadd.f32 %v67, %v68
    %v70 = vmul.f32 %v69, %v51
    %v71 = vadd.f32 %v70, 1e-05
    %v72 = vrsqrt.pop %v71
    %v73 = vmul.f32 %v53, %v72
    %v74 = vmul.f32 %v54, %v72
    %v75 = vmul.f32 %v55, %v72
    %v76 = vmul.f32 %v56, %v72
    %78 = vset.pattern.permute.xlu0 0
    %79 = vperm.xlu0 %78, %v29
    %v80 = vpop.permute.xlu0 %79
    %83 = vset.pattern.permute.xlu0 0
    %84 = vperm.xlu0 %83, %v30
    %v85 = vpop.permute.xlu0 %84
    %88 = vset.pattern.permute.xlu0 0
    %89 = vperm.xlu0 %88, %v31
    %v90 = vpop.permute.xlu0 %89
    %93 = vset.pattern.permute.xlu0 0
    %94 = vperm.xlu0 %93, %v32
    %v95 = vpop.permute.xlu0 %94
    %vm97 = vcmask 261120
    %v99 = vsel %vm97, %v34, 0
    %v102 = vsel %vm97, %v35, 0
    %v105 = vsel %vm97, %v36, 0
    %v108 = vsel %vm97, %v37, 0
    %110 = vmatprep.subr.mxu0 0.0
    %111 = vmatpush1.msra.mxu0 %v73
    %112 = vmatprep.subr.mxu0 0.0
    %113 = vmatpush1.msra.mxu0 %v74
    %114 = vmatprep.subr.mxu0 0.0
    %115 = vmatpush1.msra.mxu0 %v75
    %116 = vmatprep.subr.mxu0 0.0
    %117 = vmatpush1.msra.mxu0 %v76
    %118 = vmatprep.subr.mxu0 0.0
    %119 = vmatpush1.msra.mxu0 0.0
    %120 = vmatprep.subr.mxu0 0.0
    %121 = vmatpush1.msra.mxu0 0.0
    %122 = vmatprep.subr.mxu0 0.0
    %123 = vmatpush1.msra.mxu0 0.0
    %124 = vmatprep.subr.mxu0 0.0
    %125 = vmatpush1.msra.mxu0 0.0
    %126 = vmatprep.subr.mxu0 0.0
    %127 = vmatpush1.msra.mxu0 0.0
    %128 = vmatprep.subr.mxu0 0.0
    %129 = vmatpush1.msra.mxu0 0.0
    %130 = vmatprep.subr.mxu0 0.0
    %131 = vmatpush1.msra.mxu0 0.0
    %132 = vmatprep.subr.mxu0 0.0
    %133 = vmatpush1.msra.mxu0 0.0
    %134 = vmatprep.subr.mxu0 0.0
    %135 = vmatpush1.msra.mxu0 0.0
    %136 = vmatprep.subr.mxu0 0.0
    %137 = vmatpush1.msra.mxu0 0.0
    %138 = vmatprep.subr.mxu0 0.0
    %139 = vmatpush1.msra.mxu0 0.0
    %140 = vmatprep.subr.mxu0 0.0
    %141 = vmatpush1.msra.mxu0 0.0
    %142 = vmatprep.subr.mxu0 0.0
    %143 = vmatpush1.msra.mxu0 0.0
    %144 = vmatprep.subr.mxu0 0.0
    %145 = vmatpush1.msra.mxu0 0.0
    %146 = vmatprep.subr.mxu0 0.0
    %147 = vmatpush1.msra.mxu0 0.0
    %148 = vmatprep.subr.mxu0 0.0
    %149 = vmatpush1.msra.mxu0 0.0
    %150 = vmatprep.subr.mxu0 0.0
    %151 = vmatpush1.msra.mxu0 0.0
    %152 = vmatprep.subr.mxu0 0.0
    %153 = vmatpush1.msra.mxu0 0.0
    %154 = vmatprep.subr.mxu0 0.0
    %155 = vmatpush1.msra.mxu0 0.0
    %156 = vmatprep.subr.mxu0 0.0
    %157 = vmatpush1.msra.mxu0 0.0
    %158 = vmatprep.subr.mxu0 0.0
    %159 = vmatpush1.msra.mxu0 0.0
    %160 = vmatprep.subr.mxu0 0.0
    %161 = vmatpush1.msra.mxu0 0.0
    %162 = vmatprep.subr.mxu0 0.0
    %163 = vmatpush1.msra.mxu0 0.0
    %164 = vmatprep.subr.mxu0 0.0
    %165 = vmatpush1.msra.mxu0 0.0
    %166 = vmatprep.subr.mxu0 0.0
    %167 = vmatpush1.msra.mxu0 0.0
    %168 = vmatprep.subr.mxu0 0.0
    %169 = vmatpush1.msra.mxu0 0.0
    %170 = vmatprep.subr.mxu0 0.0
    %171 = vmatpush1.msra.mxu0 0.0
    %172 = vmatprep.subr.mxu0 0.0
    %173 = vmatpush1.msra.mxu0 0.0
    %174 = vmatprep.mubr.f32.mxu0 0.0
    %175 = vmatmul.mubr.f32.gmra.mrb[0].mxu0 %v99
    %v176 = vpop.f32.mrb[0].mxu0
    %v177 = vadd.f32 %v80, %v176
    %v178 = vpop.f32.mrb[0].mxu0
    %179 = vmatprep.mubr.f32.mxu0 0.0
    %180 = vmatmul.mubr.f32.gmra.mrb[0].mxu0 %v102
    %v181 = vpop.f32.mrb[0].mxu0
    %v182 = vadd.f32 %v85, %v181
    %v183 = vpop.f32.mrb[0].mxu0
    %184 = vmatprep.mubr.f32.mxu0 0.0
    %185 = vmatmul.mubr.f32.gmra.mrb[0].mxu0 %v105
    %v186 = vpop.f32.mrb[0].mxu0
    %v187 = vadd.f32 %v90, %v186
    %v188 = vpop.f32.mrb[0].mxu0
    %189 = vmatprep.mubr.f32.mxu0 0.0
    %190 = vmatmul.mubr.f32.gmra.mrb[0].mxu0 %v108
    %v191 = vpop.f32.mrb[0].mxu0
    %v192 = vadd.f32 %v95, %v191
    %v193 = vpop.f32.mrb[0].mxu0
    %194 = vdwg.mxu0
    %v195 = vmul.f32 %v177, 0.5
    %v196 = vmul.f32 %v182, 0.5
    %v197 = vmul.f32 %v187, 0.5
    %v198 = vmul.f32 %v192, 0.5
    %v199 = vmul.f32 %v177, 0.70710677
    %v200 = vmul.f32 %v182, 0.70710677
    %v201 = vmul.f32 %v187, 0.70710677
    %v202 = vmul.f32 %v192, 0.70710677
    %v203 = verf.f32.pop %v199
    %v204 = verf.f32.pop %v200
    %v205 = verf.f32.pop %v201
    %v206 = verf.f32.pop %v202
    %v207 = vadd.f32 %v203, 1.0
    %v208 = vadd.f32 %v204, 1.0
    %v209 = vadd.f32 %v205, 1.0
    %v210 = vadd.f32 %v206, 1.0
    %v211 = vmul.f32 %v195, %v207
    %v212 = vmul.f32 %v196, %v208
    %v213 = vmul.f32 %v197, %v209
    %v214 = vmul.f32 %v198, %v210
    %215 = vset.pattern.permute.xlu0 1
    %216 = vperm.xlu0 %215, %v29
    %v217 = vpop.permute.xlu0 %216
    %219 = vset.pattern.permute.xlu0 1
    %220 = vperm.xlu0 %219, %v30
    %v221 = vpop.permute.xlu0 %220
    %223 = vset.pattern.permute.xlu0 1
    %224 = vperm.xlu0 %223, %v31
    %v225 = vpop.permute.xlu0 %224
    %227 = vset.pattern.permute.xlu0 1
    %228 = vperm.xlu0 %227, %v32
    %v229 = vpop.permute.xlu0 %228
    %v231 = vmul.f32 %v211, %v217
    %v232 = vmul.f32 %v212, %v221
    %v233 = vmul.f32 %v213, %v225
    %v234 = vmul.f32 %v214, %v229
    %v235 = vadd.f32 %v231, %v232
    %v236 = vadd.f32 %v235, %v233
    %v237 = vadd.f32 %v236, %v234
    %v238 = vrot.slane %v237, 4
    %v239 = vadd.f32 %v237, %v238
    %v240 = vrot.slane %v239, 2
    %v241 = vadd.f32 %v239, %v240
    %v242 = vrot.slane %v241, 1
    %v243 = vadd.f32 %v241, %v242
    %244 = vset.pattern.permute.xlu0 2
    %245 = vperm.xlu0 %244, %v29
    %v246 = vpop.permute.xlu0 %245
    %248 = vset.pattern.permute.xlu0 2
    %249 = vperm.xlu0 %248, %v30
    %v250 = vpop.permute.xlu0 %249
    %252 = vset.pattern.permute.xlu0 2
    %253 = vperm.xlu0 %252, %v31
    %v254 = vpop.permute.xlu0 %253
    %256 = vset.pattern.permute.xlu0 2
    %257 = vperm.xlu0 %256, %v32
    %v258 = vpop.permute.xlu0 %257
    %v260 = vmul.f32 %v211, %v246
    %v261 = vmul.f32 %v212, %v250
    %v262 = vmul.f32 %v213, %v254
    %v263 = vmul.f32 %v214, %v258
    %v264 = vadd.f32 %v260, %v261
    %v265 = vadd.f32 %v264, %v262
    %v266 = vadd.f32 %v265, %v263
    %v267 = vrot.slane %v266, 4
    %v268 = vadd.f32 %v266, %v267
    %v269 = vrot.slane %v268, 2
    %v270 = vadd.f32 %v268, %v269
    %v271 = vrot.slane %v270, 1
    %v272 = vadd.f32 %v270, %v271
    %273 = vadd.xlane.f32.xlu0 %v272
    %v274 = vpop.xlane.xlu0 %273
    %v275 = vmul.f32 %v274, 0.0078125
    %v276 = vadd.f32 %v275, %v33
    %278 = vset.pattern.permute.xlu0 3
    %279 = vperm.xlu0 %278, %v276
    %v280 = vpop.permute.xlu0 %279
    %v282 = vadd.f32 %v243, %v280
    %v283 = vmul.f32 %v282, 0.5
    %v284 = vmul.f32 %v282, 0.70710677
    %v285 = verf.f32.pop %v284
    %v286 = vadd.f32 %v285, 1.0
    %v287 = vmul.f32 %v283, %v286
    %288 = vst [vmem:[#allocation5] sm:$0x1] %v287
    %s289 = scalar_lea.vmem [#allocation2], 32
    %v290 = vld [vmem:[%s289] sm:$0xff]
    %v291 = vld [vmem:[%s289 + $0x8] sm:$0xff]
    %v292 = vld [vmem:[%s289 + $0x10] sm:$0xff]
    %v293 = vld [vmem:[%s289 + $0x18] sm:$0xff]
    %v294 = vadd.f32 %v290, %v291
    %v295 = vadd.f32 %v294, %v292
    %v296 = vadd.f32 %v295, %v293
    %v297 = vrot.slane %v296, 4
    %v298 = vadd.f32 %v296, %v297
    %v299 = vrot.slane %v298, 2
    %v300 = vadd.f32 %v298, %v299
    %v301 = vrot.slane %v300, 1
    %v302 = vadd.f32 %v300, %v301
    %v303 = vmul.f32 %v302, %v51
    %v304 = vsub.f32 %v290, %v303
    %v305 = vsub.f32 %v291, %v303
    %v306 = vsub.f32 %v292, %v303
    %v307 = vsub.f32 %v293, %v303
    %v308 = vmul.f32 %v304, %v304
    %v309 = vmul.f32 %v305, %v305
    %v310 = vmul.f32 %v306, %v306
    %v311 = vmul.f32 %v307, %v307
    %v312 = vadd.f32 %v308, %v309
    %v313 = vadd.f32 %v312, %v310
    %v314 = vadd.f32 %v313, %v311
    %v315 = vrot.slane %v314, 4
    %v316 = vadd.f32 %v314, %v315
    %v317 = vrot.slane %v316, 2
    %v318 = vadd.f32 %v316, %v317
    %v319 = vrot.slane %v318, 1
    %v320 = vadd.f32 %v318, %v319
    %v321 = vmul.f32 %v320, %v51
    %v322 = vadd.f32 %v321, 1e-05
    %v323 = vrsqrt.pop %v322
    %v324 = vmul.f32 %v304, %v323
    %v325 = vmul.f32 %v305, %v323
    %v326 = vmul.f32 %v306, %v323
    %v327 = vmul.f32 %v307, %v323
    %328 = vmatprep.subr.mxu0 0.0
    %329 = vmatpush1.msra.mxu0 %v324
    %330 = vmatprep.subr.mxu0 0.0
    %331 = vmatpush1.msra.mxu0 %v325
    %332 = vmatprep.subr.mxu0 0.0
    %333 = vmatpush1.msra.mxu0 %v326
    %334 = vmatprep.subr.mxu0 0.0
    %335 = vmatpush1.msra.mxu0 %v327
    %336 = vmatprep.subr.mxu0 0.0
    %337 = vmatpush1.msra.mxu0 0.0
    %338 = vmatprep.subr.mxu0 0.0
    %339 = vmatpush1.msra.mxu0 0.0
    %340 = vmatprep.subr.mxu0 0.0
    %341 = vmatpush1.msra.mxu0 0.0
    %342 = vmatprep.subr.mxu0 0.0
    %343 = vmatpush1.msra.mxu0 0.0
    %344 = vmatprep.subr.mxu0 0.0
    %345 = vmatpush1.msra.mxu0 0.0
    %346 = vmatprep.subr.mxu0 0.0
    %347 = vmatpush1.msra.mxu0 0.0
    %348 = vmatprep.subr.mxu0 0.0
    %349 = vmatpush1.msra.mxu0 0.0
    %350 = vmatprep.subr.mxu0 0.0
    %351 = vmatpush1.msra.mxu0 0.0
    %352 = vmatprep.subr.mxu0 0.0
    %353 = vmatpush1.msra.mxu0 0.0
    %354 = vmatprep.subr.mxu0 0.0
    %355 = vmatpush1.msra.mxu0 0.0
    %356 = vmatprep.subr.mxu0 0.0
    %357 = vmatpush1.msra.mxu0 0.0
    %358 = vmatprep.subr.mxu0 0.0
    %359 = vmatpush1.msra.mxu0 0.0
    %360 = vmatprep.subr.mxu0 0.0
    %361 = vmatpush1.msra.mxu0 0.0
    %362 = vmatprep.subr.mxu0 0.0
    %363 = vmatpush1.msra.mxu0 0.0
    %364 = vmatprep.subr.mxu0 0.0
    %365 = vmatpush1.msra.mxu0 0.0
    %366 = vmatprep.subr.mxu0 0.0
    %367 = vmatpush1.msra.mxu0 0.0
    %368 = vmatprep.subr.mxu0 0.0
    %369 = vmatpush1.msra.mxu0 0.0
    %370 = vmatprep.subr.mxu0 0.0
    %371 = vmatpush1.msra.mxu0 0.0
    %372 = vmatprep.subr.mxu0 0.0
    %373 = vmatpush1.msra.mxu0 0.0
    %374 = vmatprep.subr.mxu0 0.0
    %375 = vmatpush1.msra.mxu0 0.0
    %376 = vmatprep.subr.mxu0 0.0
    %377 = vmatpush1.msra.mxu0 0.0
    %378 = vmatprep.subr.mxu0 0.0
    %379 = vmatpush1.msra.mxu0 0.0
    %380 = vmatprep.subr.mxu0 0.0
    %381 = vmatpush1.msra.mxu0 0.0
    %382 = vmatprep.subr.mxu0 0.0
    %383 = vmatpush1.msra.mxu0 0.0
    %384 = vmatprep.subr.mxu0 0.0
    %385 = vmatpush1.msra.mxu0 0.0
    %386 = vmatprep.subr.mxu0 0.0
    %387 = vmatpush1.msra.mxu0 0.0
    %388 = vmatprep.subr.mxu0 0.0
    %389 = vmatpush1.msra.mxu0 0.0
    %390 = vmatprep.subr.mxu0 0.0
    %391 = vmatpush1.msra.mxu0 0.0
    %392 = vmatprep.mubr.f32.mxu0 0.0
    %393 = vmatmul.mubr.f32.gmra.mrb[0].mxu0 %v99
    %v394 = vpop.f32.mrb[0].mxu0
    %v395 = vadd.f32 %v80, %v394
    %v396 = vpop.f32.mrb[0].mxu0
    %397 = vmatprep.mubr.f32.mxu0 0.0
    %398 = vmatmul.mubr.f32.gmra.mrb[0].mxu0 %v102
    %v399 = vpop.f32.mrb[0].mxu0
    %v400 = vadd.f32 %v85, %v399
    %v401 = vpop.f32.mrb[0].mxu0
    %402 = vmatprep.mubr.f32.mxu0 0.0
    %403 = vmatmul.mubr.f32.gmra.mrb[0].mxu0 %v105
    %v404 = vpop.f32.mrb[0].mxu0
    %v405 = vadd.f32 %v90, %v404
    %v406 = vpop.f32.mrb[0].mxu0
    %407 = vmatprep.mubr.f32.mxu0 0.0
    %408 = vmatmul.mubr.f32.gmra.mrb[0].mxu0 %v108
    %v409 = vpop.f32.mrb[0].mxu0
    %v410 = vadd.f32 %v95, %v409
    %v411 = vpop.f32.mrb[0].mxu0
    %412 = vdwg.mxu0
    %v413 = vmul.f32 %v395, 0.5
    %v414 = vmul.f32 %v400, 0.5
    %v415 = vmul.f32 %v405, 0.5
    %v416 = vmul.f32 %v410, 0.5
    %v417 = vmul.f32 %v395, 0.70710677
    %v418 = vmul.f32 %v400, 0.70710677
    %v419 = vmul.f32 %v405, 0.70710677
    %v420 = vmul.f32 %v410, 0.70710677
    %v421 = verf.f32.pop %v417
    %v422 = verf.f32.pop %v418
    %v423 = verf.f32.pop %v419
    %v424 = verf.f32.pop %v420
    %v425 = vadd.f32 %v421, 1.0
    %v426 = vadd.f32 %v422, 1.0
    %v427 = vadd.f32 %v423, 1.0
    %v428 = vadd.f32 %v424, 1.0
    %v429 = vmul.f32 %v413, %v425
    %v430 = vmul.f32 %v414, %v426
    %v431 = vmul.f32 %v415, %v427
    %v432 = vmul.f32 %v416, %v428
    %v433 = vmul.f32 %v429, %v217
    %v434 = vmul.f32 %v430, %v221
    %v435 = vmul.f32 %v431, %v225
    %v436 = vmul.f32 %v432, %v229
    %v437 = vadd.f32 %v433, %v434
    %v438 = vadd.f32 %v437, %v435
    %v439 = vadd.f32 %v438, %v436
    %v440 = vrot.slane %v439, 4
    %v441 = vadd.f32 %v439, %v440
    %v442 = vrot.slane %v441, 2
    %v443 = vadd.f32 %v441, %v442
    %v444 = vrot.slane %v443, 1
    %v445 = vadd.f32 %v443, %v444
    %v446 = vmul.f32 %v429, %v246
    %v447 = vmul.f32 %v430, %v250
    %v448 = vmul.f32 %v431, %v254
    %v449 = vmul.f32 %v432, %v258
    %v450 = vadd.f32 %v446, %v447
    %v451 = vadd.f32 %v450, %v448
    %v452 = vadd.f32 %v451, %v449
    %v453 = vrot.slane %v452, 4
    %v454 = vadd.f32 %v452, %v453
    %v455 = vrot.slane %v454, 2
    %v456 = vadd.f32 %v454, %v455
    %v457 = vrot.slane %v456, 1
    %v458 = vadd.f32 %v456, %v457
    %459 = vadd.xlane.f32.xlu0 %v458
    %v460 = vpop.xlane.xlu0 %459
    %v461 = vmul.f32 %v460, 0.0078125
    %v462 = vadd.f32 %v461, %v33
    %464 = vset.pattern.permute.xlu0 3
    %465 = vperm.xlu0 %464, %v462
    %v466 = vpop.permute.xlu0 %465
    %v468 = vadd.f32 %v445, %v466
    %v469 = vmul.f32 %v468, 0.5
    %v470 = vmul.f32 %v468, 0.70710677
    %v471 = verf.f32.pop %v470
    %v472 = vadd.f32 %v471, 1.0
    %v473 = vmul.f32 %v469, %v472
    %s474 = scalar_lea.vmem [#allocation5], 1
    %475 = vst [vmem:[%s474] sm:$0x1] %v473
    // Predicated region
    $region18: #{tpu_custom_call.1} parent=1 // pred_check
      _
    $region19: #{tpu_custom_call.1} parent=1 // pred_check_branch
      %477 = sbr.rel (0) target = $region21
    $region20: #{tpu_custom_call.1} parent=1 // pred_region
      %s479 = ssub.s32 32, 32
      %480 = vsyncadd [#allocation4], %s479
      %s481 = sshll.u32 [#allocation5], 4
      %s482 = int_to_ptr.vmem [resolvable:$true] %s481
      %487 = dma.vmem_to_hbm [thread:$0]  %s482, 32, %s3, [#allocation4], 16, 16, 1
    $region21: #{tpu_custom_call.1} parent=1 // pred_fallthru
      _
    // Predicated region
    $region22: #{tpu_custom_call.1} parent=1 // pred_check
      _
    $region23: #{tpu_custom_call.1} parent=1 // pred_check_branch
      %489 = sbr.rel (0) target = $region25
    $region24: #{tpu_custom_call.1} parent=1 // pred_region
      %490 = dma.done [#allocation4], 32
    $region25: #{tpu_custom_call.1} parent=1 // pred_fallthru
      _
    %491 = vsyncpa [#allocation3], 1
    %492 = vsyncpa [#allocation4], 1

</llo_original>
